<compile_context>
chip_gen: v7x
topology: tpu7x:2x2x1
jax: 0.10.0
libtpu: 0.0.40
codegen_flags: <defaults>
</compile_context>

<pallas_src>
import functools

import jax
import jax.numpy as jnp
from jax.experimental import pallas as pl
from jax.experimental.pallas import tpu as pltpu


def _round_up(x, m):
    return (x + m - 1) // m * m


def _mdd_kernel(y_s_ref, y_s_adv_ref, y_t_ref, y_t_adv_ref, out_ref, *,
                margin, batch):
    i = pl.program_id(0)

    y_s = y_s_ref[...].astype(jnp.float32)
    y_s_adv = y_s_adv_ref[...].astype(jnp.float32)
    y_t = y_t_ref[...].astype(jnp.float32)
    y_t_adv = y_t_adv_ref[...].astype(jnp.float32)

    tb, c = y_s.shape
    col = jax.lax.broadcasted_iota(jnp.int32, (tb, c), 1)
    row = jax.lax.broadcasted_iota(jnp.int32, (tb, 1), 0)
    valid = (i * tb + row) < batch  # (tb, 1): mask batch-padding rows

    def first_argmax_onehot(x):
        # torch.max / jnp.argmax take the first index on exact ties.
        mx = jnp.max(x, axis=1, keepdims=True)
        idx = jnp.min(jnp.where(x == mx, col, c), axis=1, keepdims=True)
        return col == idx  # (tb, c) bool one-hot

    oh_s = first_argmax_onehot(y_s)
    oh_t = first_argmax_onehot(y_t)

    # --- margin * cross_entropy(y_s_adv, argmax(y_s)), per row ----------------
    ms = jnp.max(y_s_adv, axis=1, keepdims=True)
    lse_s = jnp.log(jnp.sum(jnp.exp(y_s_adv - ms), axis=1, keepdims=True)) + ms
    picked_s = jnp.sum(jnp.where(oh_s, y_s_adv, 0.0), axis=1, keepdims=True)
    ce_row = lse_s - picked_s  # (tb, 1)  = -log_softmax[pred_s]

    # --- nll_loss(shift_log(1 - softmax(y_t_adv)), argmax(y_t)), per row ------
    # Only the picked probability is needed -> never materialize full softmax.
    mt = jnp.max(y_t_adv, axis=1, keepdims=True)
    et = jnp.exp(y_t_adv - mt)
    sum_et = jnp.sum(et, axis=1, keepdims=True)
    picked_et = jnp.sum(jnp.where(oh_t, et, 0.0), axis=1, keepdims=True)
    p_t = picked_et / sum_et  # softmax[pred_t], (tb, 1)
    # shift_log(x) = log(clamp(x + 1e-6, max=1.0)); NLL takes -value at target.
    nll_row = -jnp.log(jnp.minimum(1.0 - p_t + 1e-6, 1.0))  # (tb, 1)

    loss_row = jnp.where(valid, margin * ce_row + nll_row, 0.0)
    blk_sum = jnp.sum(loss_row)

    # Lane-dense, unmasked (8, 128) store of this block's partial sum.
    out_ref[...] = jnp.full(out_ref.shape, blk_sum, dtype=out_ref.dtype)


def margin_disparity_discrepancy(y_s, y_s_adv, y_t, y_t_adv, margin=4.0):
    """Pallas TPU implementation of MarginDisparityDiscrepancy (reduction='mean')."""
    B, C = y_s.shape
    itemsize = jnp.dtype(y_s.dtype).itemsize

    # Batch tile: biggest multiple of 8 sublanes such that the four inputs,
    # double-buffered by the pipeline, fit a ~24 MiB VMEM budget (v7x-safe).
    bytes_per_row = 4 * C * itemsize            # one row across all four inputs
    max_tb = (24 * 1024 * 1024) // (2 * max(1, bytes_per_row))
    max_tb = max(8, (max_tb // 8) * 8)
    tb = min(_round_up(B, 8), max_tb)

    bp = _round_up(B, tb)
    if bp != B:
        pad = ((0, bp - B), (0, 0))
        y_s, y_s_adv, y_t, y_t_adv = (
            jnp.pad(a, pad) for a in (y_s, y_s_adv, y_t, y_t_adv))
    nblk = bp // tb

    step_bytes = 4 * tb * C * itemsize          # one set of input tiles
    vmem_limit = int(min(64 * 1024 * 1024,
                         max(16 * 1024 * 1024, 2 * step_bytes + (2 << 20))))

    kernel = functools.partial(_mdd_kernel, margin=float(margin), batch=B)
    cost = pl.CostEstimate(
        flops=20 * bp * C,
        transcendentals=2 * bp * C,
        bytes_accessed=4 * bp * C * itemsize + nblk * 8 * 128 * 4,
    )

    in_spec = pl.BlockSpec((tb, C), lambda i: (i, 0))
    partials = pl.pallas_call(
        kernel,
        out_shape=jax.ShapeDtypeStruct((nblk, 8, 128), jnp.float32),
        grid_spec=pl.GridSpec(
            grid=(nblk,),
            in_specs=[in_spec, in_spec, in_spec, in_spec],
            out_specs=pl.BlockSpec((1, 8, 128), lambda i: (i, 0, 0)),
        ),
        compiler_params=pltpu.CompilerParams(
            dimension_semantics=("parallel",),
            vmem_limit_bytes=vmem_limit,
        ),
        cost_estimate=cost,
    )(y_s, y_s_adv, y_t, y_t_adv)

    # Tiny final reduction over per-block partial sums; divide by the true B.
    return jnp.sum(partials[:, 0, 0]) / B


def _reference_mdd(y_s, y_s_adv, y_t, y_t_adv, margin=4.0):
    """Pure-JAX reference for sanity checking."""
    pred_s = jnp.argmax(y_s, axis=1)
    pred_t = jnp.argmax(y_t, axis=1)
    log_sm_s = jax.nn.log_softmax(y_s_adv, axis=1)
    ce = -jnp.take_along_axis(log_sm_s, pred_s[:, None], axis=1)[:, 0]
    sm_t = jax.nn.softmax(y_t_adv, axis=1)
    shifted = jnp.log(jnp.minimum(1.0 - sm_t + 1e-6, 1.0))
    nll = -jnp.take_along_axis(shifted, pred_t[:, None], axis=1)[:, 0]
    return margin * jnp.mean(ce) + jnp.mean(nll)


if __name__ == "__main__":
    key = jax.random.PRNGKey(0)
    k1, k2, k3, k4 = jax.random.split(key, 4)
    batch, num_classes = 10, 4  # B not a multiple of 8 -> exercises padding/mask
    y_s = jax.random.normal(k1, (batch, num_classes), dtype=jnp.float32)
    y_s_adv = jax.random.normal(k2, (batch, num_classes), dtype=jnp.float32)
    y_t = jax.random.normal(k3, (batch, num_classes), dtype=jnp.float32)
    y_t_adv = jax.random.normal(k4, (batch, num_classes), dtype=jnp.float32)

    out = margin_disparity_discrepancy(y_s, y_s_adv, y_t, y_t_adv, margin=4.0)
    out = jax.block_until_ready(out)

    ref = _reference_mdd(y_s, y_s_adv, y_t, y_t_adv, margin=4.0)
    assert jnp.allclose(out, ref, rtol=1e-5, atol=1e-5), (out, ref)

    print("KERNEL_OK")
</pallas_src>

<mosaic_0001>
module attributes {stable_mosaic.version = 11 : i64} {
  func.func @_mdd_kernel(%arg0: i32, %arg1: memref<16x4xf32, #tpu.memory_space<vmem>>, %arg2: memref<16x4xf32, #tpu.memory_space<vmem>>, %arg3: memref<16x4xf32, #tpu.memory_space<vmem>>, %arg4: memref<16x4xf32, #tpu.memory_space<vmem>>, %arg5: memref<1x8x128xf32, #tpu.memory_space<vmem>>) attributes {dimension_semantics = [#tpu.dimension_semantics<parallel>], iteration_bounds = array<i64: 1>, scalar_prefetch = 0 : i64, scratch_operands = 0 : i64, tpu.core_type = #tpu.core_type<tc>, window_params = [{transform_indices = @transform_0, window_bounds = array<i64: 16, 4>}, {transform_indices = @transform_1, window_bounds = array<i64: 16, 4>}, {transform_indices = @transform_2, window_bounds = array<i64: 16, 4>}, {transform_indices = @transform_3, window_bounds = array<i64: 16, 4>}, {transform_indices = @transform_4, window_bounds = array<i64: 1, 8, 128>}]} {
    %c0 = arith.constant 0 : index
    %c0_0 = arith.constant 0 : index
    %0 = vector.load %arg1[%c0, %c0_0] : memref<16x4xf32, #tpu.memory_space<vmem>>, vector<16x4xf32>
    %c0_1 = arith.constant 0 : index
    %c0_2 = arith.constant 0 : index
    %1 = vector.load %arg2[%c0_1, %c0_2] : memref<16x4xf32, #tpu.memory_space<vmem>>, vector<16x4xf32>
    %c0_3 = arith.constant 0 : index
    %c0_4 = arith.constant 0 : index
    %2 = vector.load %arg3[%c0_3, %c0_4] : memref<16x4xf32, #tpu.memory_space<vmem>>, vector<16x4xf32>
    %c0_5 = arith.constant 0 : index
    %c0_6 = arith.constant 0 : index
    %3 = vector.load %arg4[%c0_5, %c0_6] : memref<16x4xf32, #tpu.memory_space<vmem>>, vector<16x4xf32>
    %4 = tpu.iota {dimensions = array<i32: 1>} : vector<16x4xi32>
    %5 = tpu.iota {dimensions = array<i32: 0>} : vector<16x1xi32>
    %c16_i32 = arith.constant 16 : i32
    %6 = arith.muli %arg0, %c16_i32 : i32
    %7 = vector.broadcast %6 : i32 to vector<16x1xi32>
    %8 = arith.addi %7, %5 : vector<16x1xi32>
    %c10_i32 = arith.constant 10 : i32
    %9 = vector.broadcast %c10_i32 : i32 to vector<16x1xi32>
    %10 = arith.cmpi slt, %8, %9 : vector<16x1xi32>
    %cst = arith.constant dense<0xFF800000> : vector<16xf32>
    %11 = vector.multi_reduction <maximumf>, %0, %cst [1] : vector<16x4xf32> to vector<16xf32>
    %12 = vector.shape_cast %11 : vector<16xf32> to vector<16x1xf32>
    %13 = vector.broadcast %12 : vector<16x1xf32> to vector<16x4xf32>
    %14 = arith.cmpf oeq, %0, %13 : vector<16x4xf32>
    %c4_i32 = arith.constant 4 : i32
    %15 = vector.broadcast %c4_i32 : i32 to vector<16x4xi32>
    %16 = arith.select %14, %4, %15 : vector<16x4xi1>, vector<16x4xi32>
    %cst_7 = arith.constant dense<2147483647> : vector<16xi32>
    %17 = vector.multi_reduction <minsi>, %16, %cst_7 [1] : vector<16x4xi32> to vector<16xi32>
    %18 = vector.shape_cast %17 : vector<16xi32> to vector<16x1xi32>
    %19 = vector.broadcast %18 : vector<16x1xi32> to vector<16x4xi32>
    %20 = arith.cmpi eq, %4, %19 : vector<16x4xi32>
    %cst_8 = arith.constant dense<0xFF800000> : vector<16xf32>
    %21 = vector.multi_reduction <maximumf>, %2, %cst_8 [1] : vector<16x4xf32> to vector<16xf32>
    %22 = vector.shape_cast %21 : vector<16xf32> to vector<16x1xf32>
    %23 = vector.broadcast %22 : vector<16x1xf32> to vector<16x4xf32>
    %24 = arith.cmpf oeq, %2, %23 : vector<16x4xf32>
    %c4_i32_9 = arith.constant 4 : i32
    %25 = vector.broadcast %c4_i32_9 : i32 to vector<16x4xi32>
    %26 = arith.select %24, %4, %25 : vector<16x4xi1>, vector<16x4xi32>
    %cst_10 = arith.constant dense<2147483647> : vector<16xi32>
    %27 = vector.multi_reduction <minsi>, %26, %cst_10 [1] : vector<16x4xi32> to vector<16xi32>
    %28 = vector.shape_cast %27 : vector<16xi32> to vector<16x1xi32>
    %29 = vector.broadcast %28 : vector<16x1xi32> to vector<16x4xi32>
    %30 = arith.cmpi eq, %4, %29 : vector<16x4xi32>
    %cst_11 = arith.constant dense<0xFF800000> : vector<16xf32>
    %31 = vector.multi_reduction <maximumf>, %1, %cst_11 [1] : vector<16x4xf32> to vector<16xf32>
    %32 = vector.shape_cast %31 : vector<16xf32> to vector<16x1xf32>
    %33 = vector.broadcast %32 : vector<16x1xf32> to vector<16x4xf32>
    %34 = arith.subf %1, %33 : vector<16x4xf32>
    %35 = math.exp %34 : vector<16x4xf32>
    %cst_12 = arith.constant dense<0.000000e+00> : vector<16xf32>
    %36 = vector.multi_reduction <add>, %35, %cst_12 [1] : vector<16x4xf32> to vector<16xf32>
    %37 = vector.shape_cast %36 : vector<16xf32> to vector<16x1xf32>
    %38 = math.log %37 : vector<16x1xf32>
    %39 = arith.addf %38, %32 : vector<16x1xf32>
    %cst_13 = arith.constant 0.000000e+00 : f32
    %40 = vector.broadcast %cst_13 : f32 to vector<16x4xf32>
    %41 = arith.select %20, %1, %40 : vector<16x4xi1>, vector<16x4xf32>
    %cst_14 = arith.constant dense<0.000000e+00> : vector<16xf32>
    %42 = vector.multi_reduction <add>, %41, %cst_14 [1] : vector<16x4xf32> to vector<16xf32>
    %43 = vector.shape_cast %42 : vector<16xf32> to vector<16x1xf32>
    %44 = arith.subf %39, %43 : vector<16x1xf32>
    %cst_15 = arith.constant dense<0xFF800000> : vector<16xf32>
    %45 = vector.multi_reduction <maximumf>, %3, %cst_15 [1] : vector<16x4xf32> to vector<16xf32>
    %46 = vector.shape_cast %45 : vector<16xf32> to vector<16x1xf32>
    %47 = vector.broadcast %46 : vector<16x1xf32> to vector<16x4xf32>
    %48 = arith.subf %3, %47 : vector<16x4xf32>
    %49 = math.exp %48 : vector<16x4xf32>
    %cst_16 = arith.constant dense<0.000000e+00> : vector<16xf32>
    %50 = vector.multi_reduction <add>, %49, %cst_16 [1] : vector<16x4xf32> to vector<16xf32>
    %51 = vector.shape_cast %50 : vector<16xf32> to vector<16x1xf32>
    %cst_17 = arith.constant 0.000000e+00 : f32
    %52 = vector.broadcast %cst_17 : f32 to vector<16x4xf32>
    %53 = arith.select %30, %49, %52 : vector<16x4xi1>, vector<16x4xf32>
    %cst_18 = arith.constant dense<0.000000e+00> : vector<16xf32>
    %54 = vector.multi_reduction <add>, %53, %cst_18 [1] : vector<16x4xf32> to vector<16xf32>
    %55 = vector.shape_cast %54 : vector<16xf32> to vector<16x1xf32>
    %56 = arith.divf %55, %51 : vector<16x1xf32>
    %cst_19 = arith.constant 1.000000e+00 : f32
    %57 = vector.broadcast %cst_19 : f32 to vector<16x1xf32>
    %58 = arith.subf %57, %56 : vector<16x1xf32>
    %cst_20 = arith.constant 9.99999997E-7 : f32
    %59 = vector.broadcast %cst_20 : f32 to vector<16x1xf32>
    %60 = arith.addf %58, %59 : vector<16x1xf32>
    %cst_21 = arith.constant 1.000000e+00 : f32
    %61 = vector.broadcast %cst_21 : f32 to vector<16x1xf32>
    %62 = arith.minimumf %60, %61 : vector<16x1xf32>
    %63 = math.log %62 : vector<16x1xf32>
    %cst_22 = arith.constant 0.000000e+00 : f32
    %64 = vector.broadcast %cst_22 : f32 to vector<16x1xf32>
    %65 = arith.subf %64, %63 : vector<16x1xf32>
    %cst_23 = arith.constant 4.000000e+00 : f32
    %66 = vector.broadcast %cst_23 : f32 to vector<16x1xf32>
    %67 = arith.mulf %66, %44 : vector<16x1xf32>
    %68 = arith.addf %67, %65 : vector<16x1xf32>
    %cst_24 = arith.constant 0.000000e+00 : f32
    %69 = vector.broadcast %cst_24 : f32 to vector<16x1xf32>
    %70 = arith.select %10, %68, %69 : vector<16x1xi1>, vector<16x1xf32>
    %71 = vector.shape_cast %70 : vector<16x1xf32> to vector<1x16x1xf32>
    %cst_25 = arith.constant dense<0.000000e+00> : vector<1xf32>
    %72 = vector.multi_reduction <add>, %71, %cst_25 [1, 2] : vector<1x16x1xf32> to vector<1xf32>
    %73 = vector.shape_cast %72 : vector<1xf32> to vector<1x1x1xf32>
    %74 = vector.extract %73[0, 0, 0] : f32 from vector<1x1x1xf32>
    %75 = vector.broadcast %74 : f32 to vector<1x8x128xf32>
    %c0_26 = arith.constant 0 : index
    %c0_27 = arith.constant 0 : index
    %c0_28 = arith.constant 0 : index
    %76 = vector.load %arg5[%c0_26, %c0_27, %c0_28] : memref<1x8x128xf32, #tpu.memory_space<vmem>>, vector<1x8x128xf32>
    tpu.vector_store %arg5[%c0_26, %c0_27, %c0_28], %75 {strides = array<i32>} : memref<1x8x128xf32, #tpu.memory_space<vmem>>, vector<1x8x128xf32>,
    return
  }
  func.func @transform_0(%arg0: i32) -> (i32, i32) {
    %c0_i32 = arith.constant 0 : i32
    %c0_i32_0 = arith.constant 0 : i32
    return %arg0, %c0_i32 : i32, i32
  }
  func.func @transform_1(%arg0: i32) -> (i32, i32) {
    %c0_i32 = arith.constant 0 : i32
    %c0_i32_0 = arith.constant 0 : i32
    return %arg0, %c0_i32 : i32, i32
  }
  func.func @transform_2(%arg0: i32) -> (i32, i32) {
    %c0_i32 = arith.constant 0 : i32
    %c0_i32_0 = arith.constant 0 : i32
    return %arg0, %c0_i32 : i32, i32
  }
  func.func @transform_3(%arg0: i32) -> (i32, i32) {
    %c0_i32 = arith.constant 0 : i32
    %c0_i32_0 = arith.constant 0 : i32
    return %arg0, %c0_i32 : i32, i32
  }
  func.func @transform_4(%arg0: i32) -> (i32, i32, i32) {
    %c0_i32 = arith.constant 0 : i32
    %c0_i32_0 = arith.constant 0 : i32
    %c0_i32_1 = arith.constant 0 : i32
    return %arg0, %c0_i32, %c0_i32_0 : i32, i32, i32
  }
}

</mosaic_0001>

<llo_original>
// kernel: tpu_custom_call.1
$region0: #{tpu_custom_call.1}
  #allocation0 [shape = 'u32[]', space=smem, size = 0x4, offset = 0x4, fixed_abs, tag = 'smem constant byte address 0x4 - core index']
  #allocation1 [shape = 'u32[144,128]{1,0:T(1,128)}', space=vmem, size = 0x12000, scoped, tag = 'internal scratch']
  %s0 = inlined_call_operand.vmem [shape: f32[16,4], index: 0, kind: input, shape index: {}]
  %s1 = inlined_call_operand.vmem [shape: f32[16,4], index: 1, kind: input, shape index: {}]
  %s2 = inlined_call_operand.vmem [shape: f32[16,4], index: 2, kind: input, shape index: {}]
  %s3 = inlined_call_operand.vmem [shape: f32[16,4], index: 3, kind: input, shape index: {}]
  %s4 = inlined_call_operand.hbm [shape: f32[1,8,128], index: 4, kind: output, shape index: {}]
  %s5 = sld [smem:[#allocation0]]
  $region26: #{tpu_custom_call.1} parent=0
    _
  %s7 = ssub.s32 1, %s5
  %s8 = scalar_select 0, %s7, %s5
  $region1: #{tpu_custom_call.1} parent=0
    #allocation2 [shape = 'u8[4096]{0}', space=vmem, size = 0x1000, scoped, tag = 'output window, operand 0, single buffered']
    #allocation3 [shape = 's32[1]{0}', space=sflag, size = 0x4, scoped, tag = 'scoped memory for tpu_custom_call.1']
    %9 = vsyncpa [#allocation3], 0
    // Predicated region
    $region2: #{tpu_custom_call.1} parent=1 // pred_check
      _
    $region3: #{tpu_custom_call.1} parent=1 // pred_check_branch
      %11 = sbr.rel (0) target = $region5
    $region4: #{tpu_custom_call.1} parent=1 // pred_region
      _
    $region5: #{tpu_custom_call.1} parent=1 // pred_fallthru
      _
    // Predicated region
    $region6: #{tpu_custom_call.1} parent=1 // pred_check
      _
    $region7: #{tpu_custom_call.1} parent=1 // pred_check_branch
      %13 = sbr.rel (0) target = $region9
    $region8: #{tpu_custom_call.1} parent=1 // pred_region
      _
    $region9: #{tpu_custom_call.1} parent=1 // pred_fallthru
      _
    // Predicated region
    $region10: #{tpu_custom_call.1} parent=1 // pred_check
      _
    $region11: #{tpu_custom_call.1} parent=1 // pred_check_branch
      %15 = sbr.rel (0) target = $region13
    $region12: #{tpu_custom_call.1} parent=1 // pred_region
      _
    $region13: #{tpu_custom_call.1} parent=1 // pred_fallthru
      _
    // Predicated region
    $region14: #{tpu_custom_call.1} parent=1 // pred_check
      _
    $region15: #{tpu_custom_call.1} parent=1 // pred_check_branch
      %17 = sbr.rel (0) target = $region17
    $region16: #{tpu_custom_call.1} parent=1 // pred_region
      _
    $region17: #{tpu_custom_call.1} parent=1 // pred_fallthru
      _
    %v18 = vld [vmem:[%s0] sm:$0xff]
    %v19 = vld [vmem:[%s0 + $0x8] sm:$0xff]
    %v20 = vld [vmem:[%s1] sm:$0xff]
    %v21 = vld [vmem:[%s1 + $0x8] sm:$0xff]
    %v22 = vld [vmem:[%s2] sm:$0xff]
    %v23 = vld [vmem:[%s2 + $0x8] sm:$0xff]
    %v24 = vld [vmem:[%s3] sm:$0xff]
    %v25 = vld [vmem:[%s3 + $0x8] sm:$0xff]
    %v26 = vlaneseq
    %v27 = vand.u32 %v26, 127
    %v28 = vlaneseq
    %v29 = vshrl.u32 %v28, 7
    %v30 = vadd.s32 %v29, 8
    %s31 = smul.u32 0, 16
    %v32 = vstv %s31
    %v33 = vadd.s32 %v32, %v29
    %v34 = vadd.s32 %v32, %v30
    %vm35 = vcmp.lt.s32.totalorder %v33, 10
    %vm36 = vcmp.lt.s32.totalorder %v34, 10
    %vm37 = vcmask 31744
    %v38 = vsel %vm37, %v18, -inf
    %39 = vmax.xlane.f32.xlu0 %v38
    %v40 = vpop.xlane.xlu0 %39
    %v41 = vsel %vm37, %v19, -inf
    %42 = vmax.xlane.f32.xlu0 %v41
    %v43 = vpop.xlane.xlu0 %42
    %vm44 = vcmp.eq.f32.partialorder %v18, %v40
    %vm45 = vcmp.eq.f32.partialorder %v19, %v43
    %v46 = vsel %vm44, %v27, 4
    %v47 = vsel %vm45, %v27, 4
    %v48 = vsel %vm37, %v46, 2147483647
    %v49 = vand.u32 %v48, 65535
    %v50 = vshra.s32 %v48, 16
    %v51 = vcvt.s32.f32 %v49
    %v52 = vcvt.s32.f32 %v50
    %53 = vmin.xlane.f32.xlu0 %v52
    %v54 = vpop.xlane.xlu0 %53
    %vm55 = vcmp.eq.f32.partialorder %v52, %v54
    %v56 = vsel %vm55, %v51, inf
    %57 = vmin.xlane.f32.xlu0 %v56
    %v58 = vpop.xlane.xlu0 %57
    %v59 = vcvt.f32.s32 %v58
    %v60 = vcvt.f32.s32 %v54
    %v61 = vshll.u32 %v60, 16
    %v62 = vadd.s32 %v61, %v59
    %v63 = vsel %vm37, %v47, 2147483647
    %v64 = vand.u32 %v63, 65535
    %v65 = vshra.s32 %v63, 16
    %v66 = vcvt.s32.f32 %v64
    %v67 = vcvt.s32.f32 %v65
    %68 = vmin.xlane.f32.xlu0 %v67
    %v69 = vpop.xlane.xlu0 %68
    %vm70 = vcmp.eq.f32.partialorder %v67, %v69
    %v71 = vsel %vm70, %v66, inf
    %72 = vmin.xlane.f32.xlu0 %v71
    %v73 = vpop.xlane.xlu0 %72
    %v74 = vcvt.f32.s32 %v73
    %v75 = vcvt.f32.s32 %v69
    %v76 = vshll.u32 %v75, 16
    %v77 = vadd.s32 %v76, %v74
    %vm78 = vcmp.eq.s32.totalorder %v27, %v62
    %vm79 = vcmp.eq.s32.totalorder %v27, %v77
    %v80 = vsel %vm37, %v22, -inf
    %81 = vmax.xlane.f32.xlu0 %v80
    %v82 = vpop.xlane.xlu0 %81
    %v83 = vsel %vm37, %v23, -inf
    %84 = vmax.xlane.f32.xlu0 %v83
    %v85 = vpop.xlane.xlu0 %84
    %vm86 = vcmp.eq.f32.partialorder %v22, %v82
    %vm87 = vcmp.eq.f32.partialorder %v23, %v85
    %v88 = vsel %vm86, %v27, 4
    %v89 = vsel %vm87, %v27, 4
    %v90 = vsel %vm37, %v88, 2147483647
    %v91 = vand.u32 %v90, 65535
    %v92 = vshra.s32 %v90, 16
    %v93 = vcvt.s32.f32 %v91
    %v94 = vcvt.s32.f32 %v92
    %95 = vmin.xlane.f32.xlu0 %v94
    %v96 = vpop.xlane.xlu0 %95
    %vm97 = vcmp.eq.f32.partialorder %v94, %v96
    %v98 = vsel %vm97, %v93, inf
    %99 = vmin.xlane.f32.xlu0 %v98
    %v100 = vpop.xlane.xlu0 %99
    %v101 = vcvt.f32.s32 %v100
    %v102 = vcvt.f32.s32 %v96
    %v103 = vshll.u32 %v102, 16
    %v104 = vadd.s32 %v103, %v101
    %v105 = vsel %vm37, %v89, 2147483647
    %v106 = vand.u32 %v105, 65535
    %v107 = vshra.s32 %v105, 16
    %v108 = vcvt.s32.f32 %v106
    %v109 = vcvt.s32.f32 %v107
    %110 = vmin.xlane.f32.xlu0 %v109
    %v111 = vpop.xlane.xlu0 %110
    %vm112 = vcmp.eq.f32.partialorder %v109, %v111
    %v113 = vsel %vm112, %v108, inf
    %114 = vmin.xlane.f32.xlu0 %v113
    %v115 = vpop.xlane.xlu0 %114
    %v116 = vcvt.f32.s32 %v115
    %v117 = vcvt.f32.s32 %v111
    %v118 = vshll.u32 %v117, 16
    %v119 = vadd.s32 %v118, %v116
    %vm120 = vcmp.eq.s32.totalorder %v27, %v104
    %vm121 = vcmp.eq.s32.totalorder %v27, %v119
    %v122 = vsel %vm37, %v20, -inf
    %123 = vmax.xlane.f32.xlu0 %v122
    %v124 = vpop.xlane.xlu0 %123
    %v125 = vsel %vm37, %v21, -inf
    %126 = vmax.xlane.f32.xlu0 %v125
    %v127 = vpop.xlane.xlu0 %126
    %v128 = vsub.f32 %v20, %v124
    %v129 = vsub.f32 %v21, %v127
    %v130 = vmul.f32 %v128, 1.442695
    %v131 = vpow.pop %v130
    %v132 = vmul.f32 %v129, 1.442695
    %v133 = vpow.pop %v132
    %v134 = vsel %vm37, %v131, 0.0
    %135 = vadd.xlane.f32.xlu0 %v134
    %v136 = vpop.xlane.xlu0 %135
    %v137 = vsel %vm37, %v133, 0.0
    %138 = vadd.xlane.f32.xlu0 %v137
    %v139 = vpop.xlane.xlu0 %138
    %v140 = vlog2.pop %v136
    %v141 = vmul.f32 %v140, 0.6931472
    %v142 = vlog2.pop %v139
    %v143 = vmul.f32 %v142, 0.6931472
    %v144 = vadd.f32 %v141, %v124
    %v145 = vadd.f32 %v143, %v127
    %v146 = vsel %vm78, %v20, 0.0
    %v147 = vsel %vm79, %v21, 0.0
    %v148 = vsel %vm37, %v146, 0.0
    %149 = vadd.xlane.f32.xlu0 %v148
    %v150 = vpop.xlane.xlu0 %149
    %v151 = vsel %vm37, %v147, 0.0
    %152 = vadd.xlane.f32.xlu0 %v151
    %v153 = vpop.xlane.xlu0 %152
    %v154 = vsub.f32 %v144, %v150
    %v155 = vsub.f32 %v145, %v153
    %v156 = vsel %vm37, %v24, -inf
    %157 = vmax.xlane.f32.xlu0 %v156
    %v158 = vpop.xlane.xlu0 %157
    %v159 = vsel %vm37, %v25, -inf
    %160 = vmax.xlane.f32.xlu0 %v159
    %v161 = vpop.xlane.xlu0 %160
    %v162 = vsub.f32 %v24, %v158
    %v163 = vsub.f32 %v25, %v161
    %v164 = vmul.f32 %v162, 1.442695
    %v165 = vpow.pop %v164
    %v166 = vmul.f32 %v163, 1.442695
    %v167 = vpow.pop %v166
    %v168 = vsel %vm37, %v165, 0.0
    %169 = vadd.xlane.f32.xlu0 %v168
    %v170 = vpop.xlane.xlu0 %169
    %v171 = vsel %vm37, %v167, 0.0
    %172 = vadd.xlane.f32.xlu0 %v171
    %v173 = vpop.xlane.xlu0 %172
    %v174 = vsel %vm120, %v165, 0.0
    %v175 = vsel %vm121, %v167, 0.0
    %v176 = vsel %vm37, %v174, 0.0
    %177 = vadd.xlane.f32.xlu0 %v176
    %v178 = vpop.xlane.xlu0 %177
    %v179 = vsel %vm37, %v175, 0.0
    %180 = vadd.xlane.f32.xlu0 %v179
    %v181 = vpop.xlane.xlu0 %180
    %v182 = vrcp.pop %v170
    %v183 = vmul.f32 %v178, %v182
    %v184 = vrcp.pop %v173
    %v185 = vmul.f32 %v181, %v184
    %v186 = vsub.f32 1.0, %v183
    %v187 = vsub.f32 1.0, %v185
    %v188 = vadd.f32 %v186, 1e-06
    %v189 = vadd.f32 %v187, 1e-06
    %v190 = vmin.f32 %v188, 1.0
    %v191 = vmin.f32 %v189, 1.0
    %v192 = vlog2.pop %v190
    %v193 = vmul.f32 %v192, 0.6931472
    %v194 = vlog2.pop %v191
    %v195 = vmul.f32 %v194, 0.6931472
    %v196 = vsub.f32 0.0, %v193
    %v197 = vsub.f32 0.0, %v195
    %v198 = vmul.f32 %v154, 4.0
    %v199 = vmul.f32 %v155, 4.0
    %v200 = vadd.f32 %v198, %v196
    %v201 = vadd.f32 %v199, %v197
    %v202 = vsel %vm35, %v200, 0.0
    %v203 = vsel %vm36, %v201, 0.0
    %vm204 = vcmask 7168
    %v205 = vsel %vm204, %v202, 0.0
    %v206 = vsel %vm204, %v203, 0.0
    %v207 = vadd.f32 %v205, %v206
    %208 = vadd.xlane.f32.xlu0 %v207
    %v209 = vpop.xlane.xlu0 %208
    %v210 = vrot.slane %v209, 4
    %v211 = vadd.f32 %v209, %v210
    %v212 = vrot.slane %v211, 2
    %v213 = vadd.f32 %v211, %v212
    %v214 = vrot.slane %v213, 1
    %v215 = vadd.f32 %v213, %v214
    %s216 = vtos %v215
    %v217 = vstv %s216
    %218 = vst [vmem:[#allocation2] sm:$0xff] %v217
    // Predicated region
    $region18: #{tpu_custom_call.1} parent=1 // pred_check
      _
    $region19: #{tpu_custom_call.1} parent=1 // pred_check_branch
      %220 = sbr.rel (0) target = $region21
    $region20: #{tpu_custom_call.1} parent=1 // pred_region
      %s222 = ssub.s32 128, 128
      %223 = vsyncadd [#allocation3], %s222
      %s225 = sshll.u32 [#allocation2], 4
      %s226 = int_to_ptr.vmem [resolvable:$true] %s225
      %228 = dma.vmem_to_hbm [thread:$0]  %s226, 128, %s4, [#allocation3]
    $region21: #{tpu_custom_call.1} parent=1 // pred_fallthru
      _
    // Predicated region
    $region22: #{tpu_custom_call.1} parent=1 // pred_check
      _
    $region23: #{tpu_custom_call.1} parent=1 // pred_check_branch
      %230 = sbr.rel (0) target = $region25
    $region24: #{tpu_custom_call.1} parent=1 // pred_region
      %231 = dma.done [#allocation3], 128
    $region25: #{tpu_custom_call.1} parent=1 // pred_fallthru
      _
    %232 = vsyncpa [#allocation3], 1

</llo_original>
